<compile_context>
chip_gen: v5e
topology: v5e:2x2
jax: 0.10.0
libtpu: 0.0.40
codegen_flags: <defaults>
</compile_context>

<pallas_src>
import functools

import jax
import jax.numpy as jnp
from jax.experimental import pallas as pl
from jax.experimental.pallas import tpu as pltpu

_MIB = 1024 * 1024


# ---------------------------------------------------------------------------
# Single-pass fused kernel: one HBM read + one HBM write of x.
# ---------------------------------------------------------------------------
def _channel_gate_kernel(x_ref, w1t_ref, b1_ref, w2t_ref, b2_ref, o_ref, *, hw):
    x = x_ref[...]                                                  # (Bt, C, HW), native dtype

    # Global pools over the spatial axis; f32 accumulation, no full f32 copy.
    avg_pool = jnp.sum(x, axis=2, dtype=jnp.float32) * (1.0 / hw)   # (Bt, C)
    max_pool = jnp.max(x, axis=2).astype(jnp.float32)               # (Bt, C)

    # Shared 2-layer MLP on each pooled vector (two tiny MXU matmuls + add;
    # avoids the sublane concat relayout of the pooled rows).
    def mlp(p):
        h = jnp.dot(p, w1t_ref[...], preferred_element_type=jnp.float32) + b1_ref[...]
        h = jnp.maximum(h, 0.0)
        return jnp.dot(h, w2t_ref[...], preferred_element_type=jnp.float32) + b2_ref[...]

    att = mlp(avg_pool) + mlp(max_pool)                             # (Bt, C)
    scale = jax.nn.sigmoid(att).astype(x.dtype)                     # (Bt, C) native dtype

    # Rescale in the native dtype (broadcast over the spatial/lane axis).
    o_ref[...] = x * scale[:, :, None]


# ---------------------------------------------------------------------------
# Two-phase fallback (only when a single batch's C x HW slab would overflow
# the single-pass VMEM budget, e.g. big CBAM shapes on v7x's 64 MiB VMEM).
# ---------------------------------------------------------------------------
def _pool_kernel(x_ref, avg_ref, max_ref, *, hw):
    x = x_ref[...]                                                  # (1, Ct, HW)
    avg_ref[...] = jnp.sum(x, axis=2, keepdims=True, dtype=jnp.float32) * (1.0 / hw)
    max_ref[...] = jnp.max(x, axis=2, keepdims=True).astype(jnp.float32)


def _rescale_kernel(x_ref, scale_ref, o_ref):
    x = x_ref[...]                                                  # (1, Ct, HW)
    o_ref[...] = x * scale_ref[...].astype(x.dtype)                 # scale: (1, Ct, 1)


# ---------------------------------------------------------------------------
# Hardware / tiling heuristics.
# ---------------------------------------------------------------------------
def _tpu_vmem_and_cores():
    vmem = 64 * _MIB            # conservative default (v7x per-TensorCore VMEM)
    try:
        info = pltpu.get_tpu_info()
        vmem = int(getattr(info, "vmem_capacity_bytes", vmem))
    except Exception:
        pass
    # v7x: 2 TensorCores per chip and 64 MiB VMEM/TC; v5e/v6e: 1 TC, 128 MiB.
    num_cores = 2 if vmem <= 64 * _MIB else 1
    return vmem, num_cores


def _choose_batch_tile(B, slab_bytes, vmem_bytes, num_cores):
    # Byte-based target per input block: MB-scale to amortize per-step
    # overhead / reach the HBM roofline, while 2x(in)+2x(out) double-buffered
    # blocks stay well under VMEM.
    target = (6 * _MIB) if vmem_bytes <= 64 * _MIB else (12 * _MIB)
    bt_cap = max(1, min(B, target // max(1, slab_bytes)))
    divisors = [d for d in range(1, bt_cap + 1) if B % d == 0]
    if num_cores > 1:
        # Prefer a grid-step count that is a multiple of the TC count (v7x).
        even = [d for d in divisors if (B // d) % num_cores == 0]
        if even:
            return max(even)
    return max(divisors)


def _choose_c_tile(C, HW, itemsize, vmem_bytes):
    target = min(8 * _MIB, vmem_bytes // 8)
    best = None
    d = 8
    while d <= C:
        if C % d == 0 and d * HW * itemsize <= target:
            best = d
        d += 8
    return best


# ---------------------------------------------------------------------------
# Wrapper.
# ---------------------------------------------------------------------------
def channel_gate(x, w1, b1, w2, b2, *, force_two_phase=False):
    """CBAM ChannelGate forward.

    x : (B, C, H, W) NCHW, any float dtype (kept native for the big HBM traffic).
    w1: (C//r, C), b1: (C//r,), w2: (C, C//r), b2: (C,)   (PyTorch Linear layout).
    """
    B, C, H, W = x.shape
    HW = H * W
    x_dtype = x.dtype
    itemsize = jnp.dtype(x_dtype).itemsize

    x_flat = x.reshape(B, C, HW)

    # Pre-transpose weights so the kernels do plain row-major matmuls (f32).
    w1t = jnp.asarray(w1, jnp.float32).T            # (C, Cr)
    w2t = jnp.asarray(w2, jnp.float32).T            # (Cr, C)
    b1_2d = jnp.asarray(b1, jnp.float32)[None, :]   # (1, Cr)
    b2_2d = jnp.asarray(b2, jnp.float32)[None, :]   # (1, C)
    Cr = w1t.shape[1]

    vmem_bytes, num_cores = _tpu_vmem_and_cores()
    slab_bytes = C * HW * itemsize
    weight_bytes = 4 * (C * Cr + Cr + Cr * C + C)

    # Feasibility of the fused single-pass kernel at Bt = 1:
    # 2x(in) + 2x(out) double-buffered blocks + weights + margin.
    single_pass_need = 4 * slab_bytes + 2 * weight_bytes + 2 * _MIB
    use_single_pass = (not force_two_phase) and single_pass_need <= int(0.9 * vmem_bytes)

    if use_single_pass:
        Bt = _choose_batch_tile(B, slab_bytes, vmem_bytes, num_cores)
        grid = (B // Bt,)
        block_bytes = Bt * slab_bytes
        vmem_need = 4 * block_bytes + 2 * weight_bytes + 4 * Bt * C * 4 + 2 * _MIB
        vmem_limit = int(min(vmem_bytes, max(vmem_need, 16 * _MIB)))

        cost = pl.CostEstimate(
            flops=6 * B * C * HW + 8 * B * C * Cr,
            transcendentals=2 * B * C,
            bytes_accessed=2 * B * C * HW * itemsize + weight_bytes)

        kernel = functools.partial(_channel_gate_kernel, hw=HW)
        out_flat = pl.pallas_call(
            kernel,
            out_shape=jax.ShapeDtypeStruct((B, C, HW), x_dtype),
            grid_spec=pltpu.PrefetchScalarGridSpec(
                num_scalar_prefetch=0,
                grid=grid,
                in_specs=[
                    pl.BlockSpec((Bt, C, HW), lambda b: (b, 0, 0)),
                    pl.BlockSpec((C, Cr), lambda b: (0, 0)),
                    pl.BlockSpec((1, Cr), lambda b: (0, 0)),
                    pl.BlockSpec((Cr, C), lambda b: (0, 0)),
                    pl.BlockSpec((1, C), lambda b: (0, 0)),
                ],
                out_specs=pl.BlockSpec((Bt, C, HW), lambda b: (b, 0, 0)),
            ),
            compiler_params=pltpu.CompilerParams(
                dimension_semantics=("parallel",),
                vmem_limit_bytes=vmem_limit),
            cost_estimate=cost,
        )(x_flat, w1t, b1_2d, w2t, b2_2d)
        return out_flat.reshape(B, C, H, W)

    # ---- Two-phase fallback: pool pass -> tiny MLP in JAX -> rescale pass.
    Ct = _choose_c_tile(C, HW, itemsize, vmem_bytes)
    if Ct is None:
        # TODO(synk): C not a multiple of 8 or even an 8-channel slab exceeds
        # the budget; would need an HW-chunked accumulator variant.
        Ct = C
    n_c = C // Ct
    grid2 = (B, n_c)
    block_bytes = Ct * HW * itemsize
    pool_vmem = int(min(vmem_bytes, max(2 * block_bytes + 2 * _MIB, 16 * _MIB)))
    resc_vmem = int(min(vmem_bytes, max(4 * block_bytes + 2 * _MIB, 16 * _MIB)))

    avg3, max3 = pl.pallas_call(
        functools.partial(_pool_kernel, hw=HW),
        out_shape=(jax.ShapeDtypeStruct((B, C, 1), jnp.float32),
                   jax.ShapeDtypeStruct((B, C, 1), jnp.float32)),
        grid_spec=pltpu.PrefetchScalarGridSpec(
            num_scalar_prefetch=0,
            grid=grid2,
            in_specs=[pl.BlockSpec((1, Ct, HW), lambda b, c: (b, c, 0))],
            out_specs=(pl.BlockSpec((1, Ct, 1), lambda b, c: (b, c, 0)),
                       pl.BlockSpec((1, Ct, 1), lambda b, c: (b, c, 0))),
        ),
        compiler_params=pltpu.CompilerParams(
            dimension_semantics=("parallel", "parallel"),
            vmem_limit_bytes=pool_vmem),
        cost_estimate=pl.CostEstimate(
            flops=2 * B * C * HW, transcendentals=0,
            bytes_accessed=B * C * HW * itemsize),
    )(x_flat)

    # Tiny shared MLP + sigmoid on the pooled vectors (negligible work).
    def mlp(p):
        h = jnp.maximum(p @ w1t + b1_2d, 0.0)
        return h @ w2t + b2_2d

    att = mlp(avg3[:, :, 0]) + mlp(max3[:, :, 0])                   # (B, C)
    scale3 = jax.nn.sigmoid(att)[:, :, None]                        # (B, C, 1) f32

    out_flat = pl.pallas_call(
        _rescale_kernel,
        out_shape=jax.ShapeDtypeStruct((B, C, HW), x_dtype),
        grid_spec=pltpu.PrefetchScalarGridSpec(
            num_scalar_prefetch=0,
            grid=grid2,
            in_specs=[pl.BlockSpec((1, Ct, HW), lambda b, c: (b, c, 0)),
                      pl.BlockSpec((1, Ct, 1), lambda b, c: (b, c, 0))],
            out_specs=pl.BlockSpec((1, Ct, HW), lambda b, c: (b, c, 0)),
        ),
        compiler_params=pltpu.CompilerParams(
            dimension_semantics=("parallel", "parallel"),
            vmem_limit_bytes=resc_vmem),
        cost_estimate=pl.CostEstimate(
            flops=B * C * HW, transcendentals=0,
            bytes_accessed=2 * B * C * HW * itemsize),
    )(x_flat, scale3)

    return out_flat.reshape(B, C, H, W)


# ---------------------------------------------------------------------------
# Reference + tests.
# ---------------------------------------------------------------------------
def _init_linear(key, out_features, in_features):
    # Deterministic init mimicking torch.nn.Linear default (uniform +-1/sqrt(fan_in)).
    kw, kb = jax.random.split(key)
    bound = 1.0 / (in_features ** 0.5)
    w = jax.random.uniform(kw, (out_features, in_features), jnp.float32,
                           minval=-bound, maxval=bound)
    b = jax.random.uniform(kb, (out_features,), jnp.float32,
                           minval=-bound, maxval=bound)
    return w, b


def _reference_channel_gate(x, w1, b1, w2, b2):
    # Pure-JAX reference matching the PyTorch forward semantics.
    xf = x.astype(jnp.float32)
    avg_pool = jnp.mean(xf, axis=(2, 3))      # (B, C)
    max_pool = jnp.max(xf, axis=(2, 3))       # (B, C)

    def mlp(p):
        h = jnp.maximum(p @ w1.T + b1, 0.0)
        return h @ w2.T + b2

    att = mlp(avg_pool) + mlp(max_pool)
    scale = jax.nn.sigmoid(att)[:, :, None, None]
    return (xf * scale).astype(x.dtype)


if __name__ == "__main__":
    key = jax.random.PRNGKey(0)
    k_x, k_l1, k_l2, k_x2, k_l3, k_l4 = jax.random.split(key, 6)

    # Case 1: gate_channels=32, reduction_ratio=16, 16x16 spatial.
    B, C, H, W = 2, 32, 16, 16
    Cr = C // 16
    x = jax.random.normal(k_x, (B, C, H, W), jnp.float32)
    w1, b1 = _init_linear(k_l1, Cr, C)
    w2, b2 = _init_linear(k_l2, C, Cr)

    out = jax.block_until_ready(channel_gate(x, w1, b1, w2, b2))
    ref = _reference_channel_gate(x, w1, b1, w2, b2)
    assert out.shape == (B, C, H, W)
    assert jnp.allclose(out, ref, atol=1e-5, rtol=1e-5), "mismatch vs reference (case 1)"

    # Case 2: non-multiple-of-128 spatial (7x7 -> HW=49) without any padding.
    B2, C2, H2, W2 = 3, 16, 7, 7
    Cr2 = C2 // 4
    x2 = jax.random.normal(k_x2, (B2, C2, H2, W2), jnp.float32)
    w1b, b1b = _init_linear(k_l3, Cr2, C2)
    w2b, b2b = _init_linear(k_l4, C2, Cr2)

    out2 = jax.block_until_ready(channel_gate(x2, w1b, b1b, w2b, b2b))
    ref2 = _reference_channel_gate(x2, w1b, b1b, w2b, b2b)
    assert out2.shape == (B2, C2, H2, W2)
    assert jnp.allclose(out2, ref2, atol=1e-5, rtol=1e-5), "mismatch vs reference (case 2)"

    # Case 3: exercise the two-phase (VMEM-overflow) fallback path.
    out3 = jax.block_until_ready(channel_gate(x, w1, b1, w2, b2, force_two_phase=True))
    assert out3.shape == (B, C, H, W)
    assert jnp.allclose(out3, ref, atol=1e-5, rtol=1e-5), "mismatch vs reference (case 3)"

    print("KERNEL_OK")
</pallas_src>

<mosaic_0001>
module attributes {stable_mosaic.version = 11 : i64} {
  func.func @_channel_gate_kernel(%arg0: i32, %arg1: memref<1x32x256xf32, #tpu.memory_space<vmem>>, %arg2: memref<32x2xf32, #tpu.memory_space<vmem>>, %arg3: memref<1x2xf32, #tpu.memory_space<vmem>>, %arg4: memref<2x32xf32, #tpu.memory_space<vmem>>, %arg5: memref<1x32xf32, #tpu.memory_space<vmem>>, %arg6: memref<1x32x256xf32, #tpu.memory_space<vmem>>) attributes {dimension_semantics = [#tpu.dimension_semantics<parallel>], iteration_bounds = array<i64: 2>, scalar_prefetch = 0 : i64, scratch_operands = 0 : i64, tpu.core_type = #tpu.core_type<tc>, window_params = [{transform_indices = @transform_0, window_bounds = array<i64: 1, 32, 256>}, {pipeline_mode = #tpu.pipeline_mode<synchronous>, transform_indices = @transform_1, window_bounds = array<i64: 32, 2>}, {pipeline_mode = #tpu.pipeline_mode<synchronous>, transform_indices = @transform_2, window_bounds = array<i64: 1, 2>}, {pipeline_mode = #tpu.pipeline_mode<synchronous>, transform_indices = @transform_3, window_bounds = array<i64: 2, 32>}, {pipeline_mode = #tpu.pipeline_mode<synchronous>, transform_indices = @transform_4, window_bounds = array<i64: 1, 32>}, {transform_indices = @transform_5, window_bounds = array<i64: 1, 32, 256>}]} {
    %c0 = arith.constant 0 : index
    %c0_0 = arith.constant 0 : index
    %c0_1 = arith.constant 0 : index
    %0 = vector.load %arg1[%c0, %c0_0, %c0_1] : memref<1x32x256xf32, #tpu.memory_space<vmem>>, vector<1x32x256xf32>
    %cst = arith.constant dense<0.000000e+00> : vector<1x32xf32>
    %1 = vector.multi_reduction <add>, %0, %cst [2] : vector<1x32x256xf32> to vector<1x32xf32>
    %cst_2 = arith.constant 3.906250e-03 : f32
    %2 = vector.broadcast %cst_2 : f32 to vector<1x32xf32>
    %3 = arith.mulf %1, %2 : vector<1x32xf32>
    %cst_3 = arith.constant dense<0xFF800000> : vector<1x32xf32>
    %4 = vector.multi_reduction <maximumf>, %0, %cst_3 [2] : vector<1x32x256xf32> to vector<1x32xf32>
    %c0_4 = arith.constant 0 : index
    %c0_5 = arith.constant 0 : index
    %5 = vector.load %arg2[%c0_4, %c0_5] : memref<32x2xf32, #tpu.memory_space<vmem>>, vector<32x2xf32>
    %cst_6 = arith.constant dense<0.000000e+00> : vector<1x2xf32>
    %6 = tpu.matmul %3, %5, %cst_6 {dimension_numbers = #tpu.dot_dimension_numbers<[1], [0], [0], [1], [0, 0, 1, 1], [], []>} : vector<1x32xf32>, vector<32x2xf32>, vector<1x2xf32> -> vector<1x2xf32>
    %c0_7 = arith.constant 0 : index
    %c0_8 = arith.constant 0 : index
    %7 = vector.load %arg3[%c0_7, %c0_8] : memref<1x2xf32, #tpu.memory_space<vmem>>, vector<1x2xf32>
    %8 = arith.addf %6, %7 : vector<1x2xf32>
    %cst_9 = arith.constant 0.000000e+00 : f32
    %9 = vector.broadcast %cst_9 : f32 to vector<1x2xf32>
    %10 = arith.maximumf %8, %9 : vector<1x2xf32>
    %c0_10 = arith.constant 0 : index
    %c0_11 = arith.constant 0 : index
    %11 = vector.load %arg4[%c0_10, %c0_11] : memref<2x32xf32, #tpu.memory_space<vmem>>, vector<2x32xf32>
    %cst_12 = arith.constant dense<0.000000e+00> : vector<1x32xf32>
    %12 = tpu.matmul %10, %11, %cst_12 {dimension_numbers = #tpu.dot_dimension_numbers<[1], [0], [0], [1], [0, 0, 1, 1], [], []>} : vector<1x2xf32>, vector<2x32xf32>, vector<1x32xf32> -> vector<1x32xf32>
    %c0_13 = arith.constant 0 : index
    %c0_14 = arith.constant 0 : index
    %13 = vector.load %arg5[%c0_13, %c0_14] : memref<1x32xf32, #tpu.memory_space<vmem>>, vector<1x32xf32>
    %14 = arith.addf %12, %13 : vector<1x32xf32>
    %c0_15 = arith.constant 0 : index
    %c0_16 = arith.constant 0 : index
    %15 = vector.load %arg2[%c0_15, %c0_16] : memref<32x2xf32, #tpu.memory_space<vmem>>, vector<32x2xf32>
    %cst_17 = arith.constant dense<0.000000e+00> : vector<1x2xf32>
    %16 = tpu.matmul %4, %15, %cst_17 {dimension_numbers = #tpu.dot_dimension_numbers<[1], [0], [0], [1], [0, 0, 1, 1], [], []>} : vector<1x32xf32>, vector<32x2xf32>, vector<1x2xf32> -> vector<1x2xf32>
    %c0_18 = arith.constant 0 : index
    %c0_19 = arith.constant 0 : index
    %17 = vector.load %arg3[%c0_18, %c0_19] : memref<1x2xf32, #tpu.memory_space<vmem>>, vector<1x2xf32>
    %18 = arith.addf %16, %17 : vector<1x2xf32>
    %cst_20 = arith.constant 0.000000e+00 : f32
    %19 = vector.broadcast %cst_20 : f32 to vector<1x2xf32>
    %20 = arith.maximumf %18, %19 : vector<1x2xf32>
    %c0_21 = arith.constant 0 : index
    %c0_22 = arith.constant 0 : index
    %21 = vector.load %arg4[%c0_21, %c0_22] : memref<2x32xf32, #tpu.memory_space<vmem>>, vector<2x32xf32>
    %cst_23 = arith.constant dense<0.000000e+00> : vector<1x32xf32>
    %22 = tpu.matmul %20, %21, %cst_23 {dimension_numbers = #tpu.dot_dimension_numbers<[1], [0], [0], [1], [0, 0, 1, 1], [], []>} : vector<1x2xf32>, vector<2x32xf32>, vector<1x32xf32> -> vector<1x32xf32>
    %c0_24 = arith.constant 0 : index
    %c0_25 = arith.constant 0 : index
    %23 = vector.load %arg5[%c0_24, %c0_25] : memref<1x32xf32, #tpu.memory_space<vmem>>, vector<1x32xf32>
    %24 = arith.addf %22, %23 : vector<1x32xf32>
    %25 = arith.addf %14, %24 : vector<1x32xf32>
    %26 = arith.negf %25 : vector<1x32xf32>
    %27 = math.exp %26 : vector<1x32xf32>
    %cst_26 = arith.constant 1.000000e+00 : f32
    %28 = vector.broadcast %cst_26 : f32 to vector<1x32xf32>
    %29 = arith.addf %28, %27 : vector<1x32xf32>
    %30 = arith.divf %28, %29 : vector<1x32xf32>
    %31 = vector.shape_cast %30 : vector<1x32xf32> to vector<1x32x1xf32>
    %32 = vector.broadcast %31 : vector<1x32x1xf32> to vector<1x32x256xf32>
    %33 = arith.mulf %0, %32 : vector<1x32x256xf32>
    %c0_27 = arith.constant 0 : index
    %c0_28 = arith.constant 0 : index
    %c0_29 = arith.constant 0 : index
    %34 = vector.load %arg6[%c0_27, %c0_28, %c0_29] : memref<1x32x256xf32, #tpu.memory_space<vmem>>, vector<1x32x256xf32>
    tpu.vector_store %arg6[%c0_27, %c0_28, %c0_29], %33 {strides = array<i32>} : memref<1x32x256xf32, #tpu.memory_space<vmem>>, vector<1x32x256xf32>,
    return
  }
  func.func @transform_0(%arg0: i32) -> (i32, i32, i32) {
    %c0_i32 = arith.constant 0 : i32
    %c0_i32_0 = arith.constant 0 : i32
    %c0_i32_1 = arith.constant 0 : i32
    return %arg0, %c0_i32, %c0_i32_0 : i32, i32, i32
  }
  func.func @transform_1(%arg0: i32) -> (i32, i32) {
    %c0_i32 = arith.constant 0 : i32
    %c0_i32_0 = arith.constant 0 : i32
    %c0_i32_1 = arith.constant 0 : i32
    return %c0_i32, %c0_i32_0 : i32, i32
  }
  func.func @transform_2(%arg0: i32) -> (i32, i32) {
    %c0_i32 = arith.constant 0 : i32
    %c0_i32_0 = arith.constant 0 : i32
    %c0_i32_1 = arith.constant 0 : i32
    return %c0_i32, %c0_i32_0 : i32, i32
  }
  func.func @transform_3(%arg0: i32) -> (i32, i32) {
    %c0_i32 = arith.constant 0 : i32
    %c0_i32_0 = arith.constant 0 : i32
    %c0_i32_1 = arith.constant 0 : i32
    return %c0_i32, %c0_i32_0 : i32, i32
  }
  func.func @transform_4(%arg0: i32) -> (i32, i32) {
    %c0_i32 = arith.constant 0 : i32
    %c0_i32_0 = arith.constant 0 : i32
    %c0_i32_1 = arith.constant 0 : i32
    return %c0_i32, %c0_i32_0 : i32, i32
  }
  func.func @transform_5(%arg0: i32) -> (i32, i32, i32) {
    %c0_i32 = arith.constant 0 : i32
    %c0_i32_0 = arith.constant 0 : i32
    %c0_i32_1 = arith.constant 0 : i32
    return %arg0, %c0_i32, %c0_i32_0 : i32, i32, i32
  }
}

</mosaic_0001>

<llo_original>
// kernel: tpu_custom_call.1
$region0: #{tpu_custom_call.1}
  #allocation0 [shape = 'u32[]', space=smem, size = 0x4, offset = 0x4, fixed_abs, tag = 'smem constant byte address 0x4 - core index']
  #allocation1 [shape = 'u32[72,128]{1,0:T(1,128)}', space=vmem, size = 0x9000, scoped, tag = 'internal scratch']
  %s0 = inlined_call_operand.hbm [shape: f32[2,32,256], index: 0, kind: input, shape index: {}]
  %s1 = inlined_call_operand.vmem [shape: f32[32,2], index: 1, kind: input, shape index: {}]
  %s2 = inlined_call_operand.vmem [shape: f32[1,2], index: 2, kind: input, shape index: {}]
  %s3 = inlined_call_operand.vmem [shape: f32[2,32], index: 3, kind: input, shape index: {}]
  %s4 = inlined_call_operand.vmem [shape: f32[1,32], index: 4, kind: input, shape index: {}]
  %s5 = inlined_call_operand.hbm [shape: f32[2,32,256], index: 5, kind: output, shape index: {}]
  %s6 = sld [smem:[#allocation0]]
  $region57: #{tpu_custom_call.1} parent=0
    _
  %s8 = ssub.s32 1, %s6
  %s9 = scalar_select 0, %s8, %s6
  $region1: #{tpu_custom_call.1} parent=0
    #allocation2 [shape = 'u8[65536]{0}', space=vmem, size = 0x10000, scoped, tag = 'input window, operand 0']
    #allocation3 [shape = 's32[2]{0}', space=sflag, size = 0x8, scoped, tag = 'scoped memory for tpu_custom_call.1']
    #allocation4 [shape = 's32[2]{0}', space=sflag, size = 0x8, scoped, tag = 'scoped memory for tpu_custom_call.1']
    #allocation5 [shape = 'u8[65536]{0}', space=vmem, size = 0x10000, scoped, tag = 'output window, operand 0']
    %10 = vsyncpa [#allocation3], 0
    %s11 = scalar_lea.sflag [#allocation3], 1
    %12 = vsyncpa %s11, 0
    %13 = vsyncpa [#allocation4], 0
    %s14 = scalar_lea.sflag [#allocation4], 1
    %15 = vsyncpa %s14, 0
    loop: start=0, step=1, limit=4
    $region2: #{tpu_custom_call.1} parent=1 // loop_pre_header
      _
    $region3: #{tpu_custom_call.1} parent=1 // loop_header
      %s17 = sphi 0, %s21
      %p18 = scmp.ge.s32.totalorder %s17, 4
      %s27 = sphi 0, %s29
      %s30 = sphi 0, %s27
      %s31 = sphi 0, %s30
      %s47 = sphi 0, %s31
      %s51 = sphi 0, %s51
      %s53 = sphi 0, %s51
      %s54 = sphi 0, %s53
      %s68 = sphi 0, %s54
      %s72 = sphi 0, %s72
      %s74 = sphi 0, %s72
      %s75 = sphi 0, %s74
      %s89 = sphi 0, %s75
      %s93 = sphi 0, %s93
      %s95 = sphi 0, %s93
      %s96 = sphi 0, %s95
      %s110 = sphi 0, %s96
      %s114 = sphi 0, %s114
      %s116 = sphi 0, %s114
      %s117 = sphi 0, %s116
      %s131 = sphi 0, %s117
      %s137 = sphi 0, %s139
      %s140 = sphi 0, %s137
      %s141 = sphi 0, %s140
      %s157 = sphi 0, %s141
    $region4: #{tpu_custom_call.1} parent=1 // loop_header_branch
      %20 = sbr.rel (%p18) target = $region8
    $region5: #{tpu_custom_call.1} parent=1 // loop_body
      %s22 = ssub.s32 %s17, 1
      %s23 = ssub.s32 %s17, 2
      %s24 = sadd.s32 %s17, 1
      %s25 = ssub.s32 %s17, %s24
      %p26 = scmp.eq.s32.totalorder %s25, 0
      %s28 = sadd.s32 %s27, 1
      %s29 = scalar_select %p26, %s27, %s28
      %p32 = pneg %p26
      %p33 = scmp.eq.s32.totalorder %s17, 1
      %p34 = por %p32, %p33
      %p35 = scmp.ne.s32.totalorder %s27, %s30
      %p36 = scmp.eq.s32.totalorder %s17, 0
      %p37 = por %p35, %p36
      %p38 = scmp.ne.s32.totalorder %s27, %s30
      %p39 = scmp.eq.s32.totalorder %s22, 1
      %p40 = por %p38, %p39
      %p41 = scmp.ne.s32.totalorder %s30, %s31
      %p42 = scmp.eq.s32.totalorder %s22, 0
      %p43 = por %p41, %p42
      %p44 = scmp.ne.s32.totalorder %s30, %s31
      %p45 = scmp.eq.s32.totalorder %s23, 1
      %p46 = por %p44, %p45
      %p48 = scmp.ne.s32.totalorder %s31, %s47
      %p49 = scmp.eq.s32.totalorder %s23, 0
      %p50 = por %p48, %p49
      %s52 = sadd.s32 %s51, 1
      %p55 = scmp.eq.s32.totalorder %s17, 1
      %p56 = scmp.ne.s32.totalorder %s51, %s53
      %p57 = scmp.eq.s32.totalorder %s17, 0
      %p58 = por %p56, %p57
      %p59 = scmp.ne.s32.totalorder %s51, %s53
      %p60 = scmp.eq.s32.totalorder %s22, 1
      %p61 = por %p59, %p60
      %p62 = scmp.ne.s32.totalorder %s53, %s54
      %p63 = scmp.eq.s32.totalorder %s22, 0
      %p64 = por %p62, %p63
      %p65 = scmp.ne.s32.totalorder %s53, %s54
      %p66 = scmp.eq.s32.totalorder %s23, 1
      %p67 = por %p65, %p66
      %p69 = scmp.ne.s32.totalorder %s54, %s68
      %p70 = scmp.eq.s32.totalorder %s23, 0
      %p71 = por %p69, %p70
      %s73 = sadd.s32 %s72, 1
      %p76 = scmp.eq.s32.totalorder %s17, 1
      %p77 = scmp.ne.s32.totalorder %s72, %s74
      %p78 = scmp.eq.s32.totalorder %s17, 0
      %p79 = por %p77, %p78
      %p80 = scmp.ne.s32.totalorder %s72, %s74
      %p81 = scmp.eq.s32.totalorder %s22, 1
      %p82 = por %p80, %p81
      %p83 = scmp.ne.s32.totalorder %s74, %s75
      %p84 = scmp.eq.s32.totalorder %s22, 0
      %p85 = por %p83, %p84
      %p86 = scmp.ne.s32.totalorder %s74, %s75
      %p87 = scmp.eq.s32.totalorder %s23, 1
      %p88 = por %p86, %p87
      %p90 = scmp.ne.s32.totalorder %s75, %s89
      %p91 = scmp.eq.s32.totalorder %s23, 0
      %p92 = por %p90, %p91
      %s94 = sadd.s32 %s93, 1
      %p97 = scmp.eq.s32.totalorder %s17, 1
      %p98 = scmp.ne.s32.totalorder %s93, %s95
      %p99 = scmp.eq.s32.totalorder %s17, 0
      %p100 = por %p98, %p99
      %p101 = scmp.ne.s32.totalorder %s93, %s95
      %p102 = scmp.eq.s32.totalorder %s22, 1
      %p103 = por %p101, %p102
      %p104 = scmp.ne.s32.totalorder %s95, %s96
      %p105 = scmp.eq.s32.totalorder %s22, 0
      %p106 = por %p104, %p105
      %p107 = scmp.ne.s32.totalorder %s95, %s96
      %p108 = scmp.eq.s32.totalorder %s23, 1
      %p109 = por %p107, %p108
      %p111 = scmp.ne.s32.totalorder %s96, %s110
      %p112 = scmp.eq.s32.totalorder %s23, 0
      %p113 = por %p111, %p112
      %s115 = sadd.s32 %s114, 1
      %p118 = scmp.eq.s32.totalorder %s17, 1
      %p119 = scmp.ne.s32.totalorder %s114, %s116
      %p120 = scmp.eq.s32.totalorder %s17, 0
      %p121 = por %p119, %p120
      %p122 = scmp.ne.s32.totalorder %s114, %s116
      %p123 = scmp.eq.s32.totalorder %s22, 1
      %p124 = por %p122, %p123
      %p125 = scmp.ne.s32.totalorder %s116, %s117
      %p126 = scmp.eq.s32.totalorder %s22, 0
      %p127 = por %p125, %p126
      %p128 = scmp.ne.s32.totalorder %s116, %s117
      %p129 = scmp.eq.s32.totalorder %s23, 1
      %p130 = por %p128, %p129
      %p132 = scmp.ne.s32.totalorder %s117, %s131
      %p133 = scmp.eq.s32.totalorder %s23, 0
      %p134 = por %p132, %p133
      %s135 = ssub.s32 %s17, %s24
      %p136 = scmp.eq.s32.totalorder %s135, 0
      %s138 = sadd.s32 %s137, 1
      %s139 = scalar_select %p136, %s137, %s138
      %p142 = pneg %p136
      %p143 = scmp.eq.s32.totalorder %s17, 1
      %p144 = por %p142, %p143
      %p145 = scmp.ne.s32.totalorder %s137, %s140
      %p146 = scmp.eq.s32.totalorder %s17, 0
      %p147 = por %p145, %p146
      %p148 = scmp.ne.s32.totalorder %s137, %s140
      %p149 = scmp.eq.s32.totalorder %s22, 1
      %p150 = por %p148, %p149
      %p151 = scmp.ne.s32.totalorder %s140, %s141
      %p152 = scmp.eq.s32.totalorder %s22, 0
      %p153 = por %p151, %p152
      %p154 = scmp.ne.s32.totalorder %s140, %s141
      %p155 = scmp.eq.s32.totalorder %s23, 1
      %p156 = por %p154, %p155
      %p158 = scmp.ne.s32.totalorder %s141, %s157
      %p159 = scmp.eq.s32.totalorder %s23, 0
      %p160 = por %p158, %p159
      %p161 = scmp.le.s32.totalorder 1, %s17
      %p162 = scmp.lt.s32.totalorder %s17, 3
      %p163 = pnand %p161, %p162
      %p164 = pneg %p163
      // Predicated region
      $region9: #{tpu_custom_call.1} parent=5 // pred_check
        _
      $region10: #{tpu_custom_call.1} parent=5 // pred_check_branch
        %166 = sbr.rel (%p163) target = $region12
      $region11: #{tpu_custom_call.1} parent=5 // pred_region
        %s167 = ssub.s32 %s17, 1
        // Predicated region
        $region13: #{tpu_custom_call.1} parent=11 // pred_check
          %p168 = pneg %p64
        $region14: #{tpu_custom_call.1} parent=11 // pred_check_branch
          %170 = sbr.rel (%p168) target = $region16
        $region15: #{tpu_custom_call.1} parent=11 // pred_region
          _
        $region16: #{tpu_custom_call.1} parent=11 // pred_fallthru
          _
        // Predicated region
        $region17: #{tpu_custom_call.1} parent=11 // pred_check
          %p171 = pneg %p85
        $region18: #{tpu_custom_call.1} parent=11 // pred_check_branch
          %173 = sbr.rel (%p171) target = $region20
        $region19: #{tpu_custom_call.1} parent=11 // pred_region
          _
        $region20: #{tpu_custom_call.1} parent=11 // pred_fallthru
          _
        // Predicated region
        $region21: #{tpu_custom_call.1} parent=11 // pred_check
          %p174 = pneg %p106
        $region22: #{tpu_custom_call.1} parent=11 // pred_check_branch
          %176 = sbr.rel (%p174) target = $region24
        $region23: #{tpu_custom_call.1} parent=11 // pred_region
          _
        $region24: #{tpu_custom_call.1} parent=11 // pred_fallthru
          _
        // Predicated region
        $region25: #{tpu_custom_call.1} parent=11 // pred_check
          %p177 = pneg %p127
        $region26: #{tpu_custom_call.1} parent=11 // pred_check_branch
          %179 = sbr.rel (%p177) target = $region28
        $region27: #{tpu_custom_call.1} parent=11 // pred_region
          _
        $region28: #{tpu_custom_call.1} parent=11 // pred_fallthru
          _
      $region12: #{tpu_custom_call.1} parent=5 // pred_fallthru
        _
      %p180 = scmp.lt.s32.totalorder %s17, 2
      // Predicated region
      $region29: #{tpu_custom_call.1} parent=5 // pred_check
        %p181 = pneg %p180
      $region30: #{tpu_custom_call.1} parent=5 // pred_check_branch
        %183 = sbr.rel (%p181) target = $region32
      $region31: #{tpu_custom_call.1} parent=5 // pred_region
        // Predicated region
        $region33: #{tpu_custom_call.1} parent=31 // pred_check
          %p184 = pneg %p37
        $region34: #{tpu_custom_call.1} parent=31 // pred_check_branch
          %186 = sbr.rel (%p184) target = $region36
        $region35: #{tpu_custom_call.1} parent=31 // pred_region
          %s187 = sand.u32 %s27, 1
          %s188 = scalar_lea.sflag [#allocation3], %s187
          %s189 = sand.u32 %s27, 1
          %s190 = smul.addr %s189, 64
          %s191 = scalar_lea.vmem [#allocation2], %s190
          %193 = vsyncadd %s188, 0
          %s194 = smul.addr %s17, 8
          %s195 = smul.addr %s194, 8
          %s196 = scalar_lea.hbm %s0, %s195
          %s197 = sshll.u32 %s196, 4
          %s198 = int_to_ptr.hbm [resolvable:$true] %s197
          %s199 = sshll.u32 %s191, 4
          %s200 = int_to_ptr.vmem [resolvable:$true] %s199
          %205 = dma.hbm_to_vmem [thread:$0]  %s198, 1024, %s200, %s188, 256, 256, 16
        $region36: #{tpu_custom_call.1} parent=31 // pred_fallthru
          _
      $region32: #{tpu_custom_call.1} parent=5 // pred_fallthru
        _
      %p206 = scmp.le.s32.totalorder 1, %s17
      %p207 = scmp.lt.s32.totalorder %s17, 3
      %p208 = pnand %p206, %p207
      %p209 = pneg %p208
      // Predicated region
      $region37: #{tpu_custom_call.1} parent=5 // pred_check
        _
      $region38: #{tpu_custom_call.1} parent=5 // pred_check_branch
        %211 = sbr.rel (%p208) target = $region40
      $region39: #{tpu_custom_call.1} parent=5 // pred_region
        %s212 = ssub.s32 %s17, 1
        %s213 = sand.u32 %s30, 1
        %s214 = scalar_lea.sflag [#allocation3], %s213
        %s215 = sand.u32 %s30, 1
        %s216 = smul.addr %s215, 64
        %s217 = scalar_lea.vmem [#allocation2], %s216
        // Predicated region
        $region41: #{tpu_custom_call.1} parent=39 // pred_check
          %p218 = pneg %p43
        $region42: #{tpu_custom_call.1} parent=39 // pred_check_branch
          %220 = sbr.rel (%p218) target = $region44
        $region43: #{tpu_custom_call.1} parent=39 // pred_region
          %222 = dma.done %s214, 1024
        $region44: #{tpu_custom_call.1} parent=39 // pred_fallthru
          _
        %s223 = sand.u32 %s30, 1
        %s224 = scalar_lea.sflag [#allocation3], %s223
        %s225 = sand.u32 %s30, 1
        %s226 = smul.addr %s225, 64
        %s227 = scalar_lea.vmem [#allocation2], %s226
        %p228 = pneg %p43
        %p229 = pneg %p40
        %p230 = pneg %p64
        %p231 = pneg %p61
        %p232 = pneg %p85
        %p233 = pneg %p82
        %p234 = pneg %p106
        %p235 = pneg %p103
        %p236 = pneg %p127
        %p237 = pneg %p124
        %p238 = pneg %p153
        %p239 = pneg %p150
        %s240 = sand.u32 %s140, 1
        %s241 = scalar_lea.sflag [#allocation4], %s240
        %s242 = sand.u32 %s140, 1
        %s243 = smul.addr %s242, 64
        %s244 = scalar_lea.vmem [#allocation5], %s243
        %v245 = vld [vmem:[%s217] sm:$0xff]
        %v246 = vld [vmem:[%s217 + $0x8] sm:$0xff]
        %v247 = vld [vmem:[%s217 + $0x10] sm:$0xff]
        %v248 = vld [vmem:[%s217 + $0x18] sm:$0xff]
        %v249 = vld [vmem:[%s217 + $0x20] sm:$0xff]
        %v250 = vld [vmem:[%s217 + $0x28] sm:$0xff]
        %v251 = vld [vmem:[%s217 + $0x30] sm:$0xff]
        %v252 = vld [vmem:[%s217 + $0x38] sm:$0xff]
        %v253 = vadd.f32 %v245, %v246
        %254 = vadd.xlane.f32.xlu0 %v253
        %v255 = vpop.xlane.xlu0 %254
        %v256 = vadd.f32 %v247, %v248
        %257 = vadd.xlane.f32.xlu0 %v256
        %v258 = vpop.xlane.xlu0 %257
        %v259 = vadd.f32 %v249, %v250
        %260 = vadd.xlane.f32.xlu0 %v259
        %v261 = vpop.xlane.xlu0 %260
        %v262 = vadd.f32 %v251, %v252
        %263 = vadd.xlane.f32.xlu0 %v262
        %v264 = vpop.xlane.xlu0 %263
        %v265 = vmul.f32 %v255, 0.00390625
        %v266 = vmul.f32 %v258, 0.00390625
        %v267 = vmul.f32 %v261, 0.00390625
        %v268 = vmul.f32 %v264, 0.00390625
        %v269 = vmax.f32 %v245, %v246
        %270 = vmax.xlane.f32.xlu0 %v269
        %v271 = vpop.xlane.xlu0 %270
        %v272 = vmax.f32 %v247, %v248
        %273 = vmax.xlane.f32.xlu0 %v272
        %v274 = vpop.xlane.xlu0 %273
        %v275 = vmax.f32 %v249, %v250
        %276 = vmax.xlane.f32.xlu0 %v275
        %v277 = vpop.xlane.xlu0 %276
        %v278 = vmax.f32 %v251, %v252
        %279 = vmax.xlane.f32.xlu0 %v278
        %v280 = vpop.xlane.xlu0 %279
        %v281 = vld [vmem:[%s1] sm:$0xff]
        %v282 = vld [vmem:[%s1 + $0x8] sm:$0xff]
        %v283 = vld [vmem:[%s1 + $0x10] sm:$0xff]
        %v284 = vld [vmem:[%s1 + $0x18] sm:$0xff]
        %v285 = vld [vmem:[%s2] sm:$0x1]
        %v290 = vlaneseq
        %v291 = vand.u32 %v290, 127
        %v292 = vperm.slane %v265, %v291
        %v293 = vadd.s32 %v291, 4294967288
        %v294 = vperm.slane %v266, %v293
        %vm295 = vcmask 130112
        %v296 = vsel %vm295, %v294, %v292
        %v297 = vadd.s32 %v291, 4294967280
        %v298 = vperm.slane %v267, %v297
        %vm299 = vcmask 195712
        %v300 = vsel %vm299, %v298, %v296
        %v301 = vadd.s32 %v291, 4294967272
        %v302 = vperm.slane %v268, %v301
        %vm303 = vcmask 261312
        %v304 = vsel %vm303, %v302, %v300
        %vm305 = vcmask 261120
        %v306 = vsel %vm305, %v304, 0
        %308 = vmatpush.msra.mxu0 0.0
        %309 = vmatpush.msra.mxu0 0.0
        %310 = vmatpush.msra.mxu0 0.0
        %311 = vmatpush.msra.mxu0 0.0
        %312 = vmatpush.msra.mxu0 0.0
        %313 = vmatpush.msra.mxu0 0.0
        %314 = vmatpush.msra.mxu0 0.0
        %315 = vmatpush.msra.mxu0 0.0
        %316 = vmatpush.msra.mxu0 0.0
        %317 = vmatpush.msra.mxu0 0.0
        %318 = vmatpush.msra.mxu0 0.0
        %319 = vmatpush.msra.mxu0 0.0
        %320 = vmatpush.msra.mxu0 %v284
        %321 = vmatpush.msra.mxu0 %v283
        %322 = vmatpush.msra.mxu0 %v282
        %323 = vmatpush.msra.mxu0 %v281
        %324 = vmatmul.f32.gmra.mxu0 %v306
        %v325 = vpop.f32.mrf.mxu0
        %v326 = vadd.f32 %v285, %v325
        %327 = vdwg.mxu0
        %v328 = vmax.f32 %v326, 0.0
        %v329 = vld [vmem:[%s3] sm:$0x3]
        %v330 = vld [vmem:[%s4] sm:$0x1]
        %vm331 = vcmask 15360
        %v333 = vsel %vm331, %v328, 0
        %vm335 = vcmask 1041408
        %v337 = vsel %vm335, %v329, 0
        %339 = vmatpush.msra.mxu0 0.0
        %340 = vmatpush.msra.mxu0 0.0
        %341 = vmatpush.msra.mxu0 0.0
        %342 = vmatpush.msra.mxu0 0.0
        %343 = vmatpush.msra.mxu0 0.0
        %344 = vmatpush.msra.mxu0 0.0
        %345 = vmatpush.msra.mxu0 0.0
        %346 = vmatpush.msra.mxu0 0.0
        %347 = vmatpush.msra.mxu0 0.0
        %348 = vmatpush.msra.mxu0 0.0
        %349 = vmatpush.msra.mxu0 0.0
        %350 = vmatpush.msra.mxu0 0.0
        %351 = vmatpush.msra.mxu0 0.0
        %352 = vmatpush.msra.mxu0 0.0
        %353 = vmatpush.msra.mxu0 0.0
        %354 = vmatpush.msra.mxu0 %v337
        %355 = vmatmul.f32.gmra.mxu0 %v333
        %v356 = vpop.f32.mrf.mxu0
        %v357 = vadd.f32 %v330, %v356
        %358 = vdwg.mxu0
        %v363 = vperm.slane %v271, %v291
        %v364 = vperm.slane %v274, %v293
        %v365 = vsel %vm295, %v364, %v363
        %v366 = vperm.slane %v277, %v297
        %v367 = vsel %vm299, %v366, %v365
        %v368 = vperm.slane %v280, %v301
        %v369 = vsel %vm303, %v368, %v367
        %v370 = vsel %vm305, %v369, 0
        %372 = vmatpush.msra.mxu0 0.0
        %373 = vmatpush.msra.mxu0 0.0
        %374 = vmatpush.msra.mxu0 0.0
        %375 = vmatpush.msra.mxu0 0.0
        %376 = vmatpush.msra.mxu0 0.0
        %377 = vmatpush.msra.mxu0 0.0
        %378 = vmatpush.msra.mxu0 0.0
        %379 = vmatpush.msra.mxu0 0.0
        %380 = vmatpush.msra.mxu0 0.0
        %381 = vmatpush.msra.mxu0 0.0
        %382 = vmatpush.msra.mxu0 0.0
        %383 = vmatpush.msra.mxu0 0.0
        %384 = vmatpush.msra.mxu0 %v284
        %385 = vmatpush.msra.mxu0 %v283
        %386 = vmatpush.msra.mxu0 %v282
        %387 = vmatpush.msra.mxu0 %v281
        %388 = vmatmul.f32.gmra.mxu0 %v370
        %v389 = vpop.f32.mrf.mxu0
        %v390 = vadd.f32 %v285, %v389
        %391 = vdwg.mxu0
        %v392 = vmax.f32 %v390, 0.0
        %v394 = vsel %vm331, %v392, 0
        %396 = vmatpush.msra.mxu0 0.0
        %397 = vmatpush.msra.mxu0 0.0
        %398 = vmatpush.msra.mxu0 0.0
        %399 = vmatpush.msra.mxu0 0.0
        %400 = vmatpush.msra.mxu0 0.0
        %401 = vmatpush.msra.mxu0 0.0
        %402 = vmatpush.msra.mxu0 0.0
        %403 = vmatpush.msra.mxu0 0.0
        %404 = vmatpush.msra.mxu0 0.0
        %405 = vmatpush.msra.mxu0 0.0
        %406 = vmatpush.msra.mxu0 0.0
        %407 = vmatpush.msra.mxu0 0.0
        %408 = vmatpush.msra.mxu0 0.0
        %409 = vmatpush.msra.mxu0 0.0
        %410 = vmatpush.msra.mxu0 0.0
        %411 = vmatpush.msra.mxu0 %v337
        %412 = vmatmul.f32.gmra.mxu0 %v394
        %v413 = vpop.f32.mrf.mxu0
        %v414 = vadd.f32 %v330, %v413
        %415 = vdwg.mxu0
        %v416 = vadd.f32 %v357, %v414
        %v417 = vxor.u32 %v416, 2147483648
        %v418 = vmul.f32 %v417, 1.442695
        %v419 = vpow.pop %v418
        %v420 = vadd.f32 %v419, 1.0
        %v421 = vrcp.pop %v420
        %v422 = vmul.f32 %v420, %v421
        %v423 = vsub.f32 1.0, %v422
        %v424 = vmul.f32 %v421, %v423
        %v425 = vadd.f32 %v421, %v424
        %vm426 = vweird.f32 %v420
        %vm427 = vweird.f32 %v421
        %vm428 = vmor %vm426, %vm427
        %v429 = vsel %vm428, %v421, %v425
        %v430 = vand.u32 2147483647, %v420
        %vm431 = vcmp.eq.f32.partialorder %v430, 8.507059e+37
        %v432 = vand.u32 %v420, 2147483648
        %v433 = vor.u32 1.1754944e-38, %v432
        %v434 = vsel %vm431, %v433, %v429
        %v435 = vmul.f32 1.0, %v434
        %v436 = vperm.slane %v435, 0
        %v437 = vlaneseq
        %v438 = vshrl.u32 %v437, 7
        %440 = vset.pattern.permute.xlu0 %v438
        %441 = vperm.xlu0 %440, %v436
        %v442 = vpop.permute.xlu0 %441
        %v443 = vlaneseq
        %v444 = vshrl.u32 %v443, 7
        %v445 = vadd.s32 %v444, 8
        %446 = vset.pattern.permute.xlu0 %v445
        %447 = vperm.xlu0 %446, %v436
        %v448 = vpop.permute.xlu0 %447
        %v449 = vlaneseq
        %v450 = vshrl.u32 %v449, 7
        %v451 = vadd.s32 %v450, 16
        %452 = vset.pattern.permute.xlu0 %v451
        %453 = vperm.xlu0 %452, %v436
        %v454 = vpop.permute.xlu0 %453
        %v455 = vlaneseq
        %v456 = vshrl.u32 %v455, 7
        %v457 = vadd.s32 %v456, 24
        %458 = vset.pattern.permute.xlu0 %v457
        %459 = vperm.xlu0 %458, %v436
        %v460 = vpop.permute.xlu0 %459
        %v461 = vmul.f32 %v245, %v442
        %v462 = vmul.f32 %v246, %v442
        %v463 = vmul.f32 %v247, %v448
        %v464 = vmul.f32 %v248, %v448
        %v465 = vmul.f32 %v249, %v454
        %v466 = vmul.f32 %v250, %v454
        %v467 = vmul.f32 %v251, %v460
        %v468 = vmul.f32 %v252, %v460
        %469 = vst [vmem:[%s244] sm:$0xff] %v461
        %470 = vst [vmem:[%s244 + $0x8] sm:$0xff] %v462
        %471 = vst [vmem:[%s244 + $0x10] sm:$0xff] %v463
        %472 = vst [vmem:[%s244 + $0x18] sm:$0xff] %v464
        %473 = vst [vmem:[%s244 + $0x20] sm:$0xff] %v465
        %474 = vst [vmem:[%s244 + $0x28] sm:$0xff] %v466
        %475 = vst [vmem:[%s244 + $0x30] sm:$0xff] %v467
        %476 = vst [vmem:[%s244 + $0x38] sm:$0xff] %v468
        %s477 = sand.u32 %s140, 1
        %s478 = scalar_lea.sflag [#allocation4], %s477
        %s479 = sand.u32 %s140, 1
        %s480 = smul.addr %s479, 64
        %s481 = scalar_lea.vmem [#allocation5], %s480
        // Predicated region
        $region45: #{tpu_custom_call.1} parent=39 // pred_check
          %p482 = pneg %p150
        $region46: #{tpu_custom_call.1} parent=39 // pred_check_branch
          %484 = sbr.rel (%p482) target = $region48
        $region47: #{tpu_custom_call.1} parent=39 // pred_region
          %486 = vsyncadd %s478, 0
          %s487 = smul.addr %s22, 8
          %s488 = smul.addr %s487, 8
          %s489 = scalar_lea.hbm %s5, %s488
          %s490 = sshll.u32 %s481, 4
          %s491 = int_to_ptr.vmem [resolvable:$true] %s490
          %s492 = sshll.u32 %s489, 4
          %s493 = int_to_ptr.hbm [resolvable:$true] %s492
          %498 = dma.vmem_to_hbm [thread:$0]  %s491, 1024, %s493, %s478, 256, 256, 16
        $region48: #{tpu_custom_call.1} parent=39 // pred_fallthru
          _
      $region40: #{tpu_custom_call.1} parent=5 // pred_fallthru
        _
      %p499 = scmp.le.s32.totalorder 2, %s17
      // Predicated region
      $region49: #{tpu_custom_call.1} parent=5 // pred_check
        %p500 = pneg %p499
      $region50: #{tpu_custom_call.1} parent=5 // pred_check_branch
        %502 = sbr.rel (%p500) target = $region52
      $region51: #{tpu_custom_call.1} parent=5 // pred_region
        %s503 = ssub.s32 %s17, 2
        // Predicated region
        $region53: #{tpu_custom_call.1} parent=51 // pred_check
          %p504 = pneg %p156
        $region54: #{tpu_custom_call.1} parent=51 // pred_check_branch
          %506 = sbr.rel (%p504) target = $region56
        $region55: #{tpu_custom_call.1} parent=51 // pred_region
          %s507 = sand.u32 %s141, 1
          %s508 = scalar_lea.sflag [#allocation4], %s507
          %s509 = sand.u32 %s141, 1
          %s510 = smul.addr %s509, 64
          %s511 = scalar_lea.vmem [#allocation5], %s510
          %513 = dma.done %s508, 1024
        $region56: #{tpu_custom_call.1} parent=51 // pred_fallthru
          _
      $region52: #{tpu_custom_call.1} parent=5 // pred_fallthru
        _
    $region6: #{tpu_custom_call.1} parent=1 // loop_footer
      %s21 = sadd.s32 1, %s17
    $region7: #{tpu_custom_call.1} parent=1 // loop_footer_branch
      %16 = sbr.rel target = $region3
    $region8: #{tpu_custom_call.1} parent=1 // loop_exit
      _
    %514 = vsyncpa [#allocation3], 1
    %s515 = scalar_lea.sflag [#allocation3], 1
    %516 = vsyncpa %s515, 1
    %517 = vsyncpa [#allocation4], 1
    %s518 = scalar_lea.sflag [#allocation4], 1
    %519 = vsyncpa %s518, 1

</llo_original>
